<compile_context>
chip_gen: v7x
topology: tpu7x:2x2x1
jax: 0.10.0
libtpu: 0.0.40
codegen_flags: <defaults>
</compile_context>

<pallas_src>
import functools

import jax
import jax.numpy as jnp
from jax.experimental import pallas as pl
from jax.experimental.pallas import tpu as pltpu


def _round_up(x, m):
    return ((x + m - 1) // m) * m


def _mlp_kernel(x_ref, w1_ref, b1_ref, w2_ref, b2_ref, w3_ref, b3_ref,
                w4_ref, b4_ref, o_ref):
    # x: (1, T); hidden: (32, T) -> (16, T) -> (32, T); out: (5, T).
    x = x_ref[...]                                            # (1, T) f32
    # Layer 1 has K=1: VPU broadcast multiply (32,1) * (1,T) -> (32,T).
    h = jnp.tanh(w1_ref[...] * x + b1_ref[...])               # (32, T)
    h = jnp.tanh(
        jnp.dot(w2_ref[...], h, preferred_element_type=jnp.float32)
        + b2_ref[...])                                        # (16, T)
    h = jnp.tanh(
        jnp.dot(w3_ref[...], h, preferred_element_type=jnp.float32)
        + b3_ref[...])                                        # (32, T)
    y = (jnp.dot(w4_ref[...], h, preferred_element_type=jnp.float32)
         + b4_ref[...])                                       # (5, T)
    o_ref[...] = y.astype(o_ref.dtype)


@functools.partial(jax.jit, static_argnames=("tile_n",))
def newton2d_forward(x, params, *, tile_n=None):
    """x: (N, 1) float32 (as the module's Linear(1, 32) implies).
    params: tuple of (W, b) pairs, W stored as (in, out), b as (1, out)."""
    n = x.shape[0]
    if tile_n is None:
        # Big lane tiles amortize the ~0.35 us per-grid-step overhead; even at
        # 4096 lanes the live (32, T) f32 activations are only 512 KiB, far
        # inside the VMEM budget on v5e/v6e/v7x.
        tile_n = min(_round_up(n, 128), 4096)
    # Pad the batch up to a tile multiple so every grid step is full and the
    # kernel never needs masking; the padded rows are sliced off afterwards.
    n_pad = _round_up(n, tile_n)

    (w1, b1), (w2, b2), (w3, b3), (w4, b4) = params
    out_dim = w4.shape[1]

    # Transposed, lane-dense layout: weights (out, in), biases (out, 1),
    # input (1, N_pad), kernel output (out, N_pad).
    xt = x.reshape(1, n)
    if n_pad != n:
        xt = jnp.pad(xt, ((0, 0), (0, n_pad - n)))
    w1t, b1t = w1.T, b1.T
    w2t, b2t = w2.T, b2.T
    w3t, b3t = w3.T, b3.T
    w4t, b4t = w4.T, b4.T

    def const_spec(shape):
        # Tiny weight/bias blocks: same full block at every grid step, so the
        # pipeline keeps them resident in VMEM (no re-DMA across steps).
        return pl.BlockSpec(shape, lambda i: (0, 0))

    # Advisory cost estimate so XLA schedules this small call sensibly.
    flops_per_row = 2 * (1 * 32 + 32 * 16 + 16 * 32 + 32 * 5)
    cost = pl.CostEstimate(
        flops=n_pad * flops_per_row,
        transcendentals=n_pad * (32 + 16 + 32),
        bytes_accessed=n_pad * 4 * (1 + out_dim),
    )

    out_t = pl.pallas_call(
        _mlp_kernel,
        out_shape=jax.ShapeDtypeStruct((out_dim, n_pad), x.dtype),
        grid_spec=pltpu.PrefetchScalarGridSpec(
            num_scalar_prefetch=0,
            grid=(n_pad // tile_n,),
            in_specs=[
                pl.BlockSpec((1, tile_n), lambda i: (0, i)),   # x tile, lane-dense
                const_spec(w1t.shape), const_spec(b1t.shape),
                const_spec(w2t.shape), const_spec(b2t.shape),
                const_spec(w3t.shape), const_spec(b3t.shape),
                const_spec(w4t.shape), const_spec(b4t.shape),
            ],
            out_specs=pl.BlockSpec((out_dim, tile_n), lambda i: (0, i)),
        ),
        compiler_params=pltpu.CompilerParams(
            dimension_semantics=("parallel",)),
        cost_estimate=cost,
    )(xt, w1t, b1t, w2t, b2t, w3t, b3t, w4t, b4t)

    # Transpose the (5, N_pad) lane-dense result back to the module's (N, 5).
    # (Keeping the kernel output lane-dense avoids masked vst; this small
    # wrapper-side transpose/slice is layout plumbing, not compute.)
    return out_t.T[:n]


def init_params(key):
    """Deterministic init mimicking torch.nn.Linear default (U[-1/sqrt(fan_in), +])."""
    dims = [(1, 32), (32, 16), (16, 32), (32, 5)]
    params = []
    for (fan_in, fan_out) in dims:
        key, kw, kb = jax.random.split(key, 3)
        bound = 1.0 / (fan_in ** 0.5)
        w = jax.random.uniform(kw, (fan_in, fan_out), jnp.float32, -bound, bound)
        b = jax.random.uniform(kb, (1, fan_out), jnp.float32, -bound, bound)
        params.append((w, b))
    return tuple(params)


def reference_forward(x, params):
    h = x
    for i, (w, b) in enumerate(params):
        h = h @ w + b
        if i < len(params) - 1:
            h = jnp.tanh(h)
    return h


if __name__ == "__main__":
    key = jax.random.PRNGKey(0)
    key, kx = jax.random.split(key)
    params = init_params(key)

    n = 256  # batch of scalar inputs, shape (N, 1) as Linear(1, 32) implies
    x = jax.random.normal(kx, (n, 1), jnp.float32)

    out = newton2d_forward(x, params)
    out = jax.block_until_ready(out)

    ref = reference_forward(x, params)
    assert out.shape == (n, 5)
    assert jnp.allclose(out, ref, atol=1e-5, rtol=1e-5)

    # Also exercise a batch that is not a multiple of the lane tile to cover
    # the padding path.
    n2 = 200
    x2 = jax.random.normal(jax.random.PRNGKey(7), (n2, 1), jnp.float32)
    out2 = jax.block_until_ready(newton2d_forward(x2, params))
    ref2 = reference_forward(x2, params)
    assert out2.shape == (n2, 5)
    assert jnp.allclose(out2, ref2, atol=1e-5, rtol=1e-5)

    print("KERNEL_OK")
</pallas_src>

<mosaic_0001>
module attributes {stable_mosaic.version = 11 : i64} {
  func.func @_mlp_kernel(%arg0: i32, %arg1: memref<1x256xf32, #tpu.memory_space<vmem>>, %arg2: memref<32x1xf32, #tpu.memory_space<vmem>>, %arg3: memref<32x1xf32, #tpu.memory_space<vmem>>, %arg4: memref<16x32xf32, #tpu.memory_space<vmem>>, %arg5: memref<16x1xf32, #tpu.memory_space<vmem>>, %arg6: memref<32x16xf32, #tpu.memory_space<vmem>>, %arg7: memref<32x1xf32, #tpu.memory_space<vmem>>, %arg8: memref<5x32xf32, #tpu.memory_space<vmem>>, %arg9: memref<5x1xf32, #tpu.memory_space<vmem>>, %arg10: memref<5x256xf32, #tpu.memory_space<vmem>>) attributes {dimension_semantics = [#tpu.dimension_semantics<parallel>], iteration_bounds = array<i64: 1>, scalar_prefetch = 0 : i64, scratch_operands = 0 : i64, tpu.core_type = #tpu.core_type<tc>, window_params = [{transform_indices = @transform_0, window_bounds = array<i64: 1, 256>}, {pipeline_mode = #tpu.pipeline_mode<synchronous>, transform_indices = @transform_1, window_bounds = array<i64: 32, 1>}, {pipeline_mode = #tpu.pipeline_mode<synchronous>, transform_indices = @transform_2, window_bounds = array<i64: 32, 1>}, {pipeline_mode = #tpu.pipeline_mode<synchronous>, transform_indices = @transform_3, window_bounds = array<i64: 16, 32>}, {pipeline_mode = #tpu.pipeline_mode<synchronous>, transform_indices = @transform_4, window_bounds = array<i64: 16, 1>}, {pipeline_mode = #tpu.pipeline_mode<synchronous>, transform_indices = @transform_5, window_bounds = array<i64: 32, 16>}, {pipeline_mode = #tpu.pipeline_mode<synchronous>, transform_indices = @transform_6, window_bounds = array<i64: 32, 1>}, {pipeline_mode = #tpu.pipeline_mode<synchronous>, transform_indices = @transform_7, window_bounds = array<i64: 5, 32>}, {pipeline_mode = #tpu.pipeline_mode<synchronous>, transform_indices = @transform_8, window_bounds = array<i64: 5, 1>}, {transform_indices = @transform_9, window_bounds = array<i64: 5, 256>}]} {
    %c0 = arith.constant 0 : index
    %c0_0 = arith.constant 0 : index
    %0 = vector.load %arg1[%c0, %c0_0] : memref<1x256xf32, #tpu.memory_space<vmem>>, vector<1x256xf32>
    %c0_1 = arith.constant 0 : index
    %c0_2 = arith.constant 0 : index
    %1 = vector.load %arg2[%c0_1, %c0_2] : memref<32x1xf32, #tpu.memory_space<vmem>>, vector<32x1xf32>
    %2 = vector.broadcast %1 : vector<32x1xf32> to vector<32x256xf32>
    %3 = vector.broadcast %0 : vector<1x256xf32> to vector<32x256xf32>
    %4 = arith.mulf %2, %3 : vector<32x256xf32>
    %c0_3 = arith.constant 0 : index
    %c0_4 = arith.constant 0 : index
    %5 = vector.load %arg3[%c0_3, %c0_4] : memref<32x1xf32, #tpu.memory_space<vmem>>, vector<32x1xf32>
    %6 = vector.broadcast %5 : vector<32x1xf32> to vector<32x256xf32>
    %7 = arith.addf %4, %6 : vector<32x256xf32>
    %8 = math.tanh %7 : vector<32x256xf32>
    %c0_5 = arith.constant 0 : index
    %c0_6 = arith.constant 0 : index
    %9 = vector.load %arg4[%c0_5, %c0_6] : memref<16x32xf32, #tpu.memory_space<vmem>>, vector<16x32xf32>
    %cst = arith.constant dense<0.000000e+00> : vector<16x256xf32>
    %10 = tpu.matmul %9, %8, %cst {dimension_numbers = #tpu.dot_dimension_numbers<[1], [0], [0], [1], [0, 0, 1, 1], [], []>} : vector<16x32xf32>, vector<32x256xf32>, vector<16x256xf32> -> vector<16x256xf32>
    %c0_7 = arith.constant 0 : index
    %c0_8 = arith.constant 0 : index
    %11 = vector.load %arg5[%c0_7, %c0_8] : memref<16x1xf32, #tpu.memory_space<vmem>>, vector<16x1xf32>
    %12 = vector.broadcast %11 : vector<16x1xf32> to vector<16x256xf32>
    %13 = arith.addf %10, %12 : vector<16x256xf32>
    %14 = math.tanh %13 : vector<16x256xf32>
    %c0_9 = arith.constant 0 : index
    %c0_10 = arith.constant 0 : index
    %15 = vector.load %arg6[%c0_9, %c0_10] : memref<32x16xf32, #tpu.memory_space<vmem>>, vector<32x16xf32>
    %cst_11 = arith.constant dense<0.000000e+00> : vector<32x256xf32>
    %16 = tpu.matmul %15, %14, %cst_11 {dimension_numbers = #tpu.dot_dimension_numbers<[1], [0], [0], [1], [0, 0, 1, 1], [], []>} : vector<32x16xf32>, vector<16x256xf32>, vector<32x256xf32> -> vector<32x256xf32>
    %c0_12 = arith.constant 0 : index
    %c0_13 = arith.constant 0 : index
    %17 = vector.load %arg7[%c0_12, %c0_13] : memref<32x1xf32, #tpu.memory_space<vmem>>, vector<32x1xf32>
    %18 = vector.broadcast %17 : vector<32x1xf32> to vector<32x256xf32>
    %19 = arith.addf %16, %18 : vector<32x256xf32>
    %20 = math.tanh %19 : vector<32x256xf32>
    %c0_14 = arith.constant 0 : index
    %c0_15 = arith.constant 0 : index
    %21 = vector.load %arg8[%c0_14, %c0_15] : memref<5x32xf32, #tpu.memory_space<vmem>>, vector<5x32xf32>
    %cst_16 = arith.constant dense<0.000000e+00> : vector<5x256xf32>
    %22 = tpu.matmul %21, %20, %cst_16 {dimension_numbers = #tpu.dot_dimension_numbers<[1], [0], [0], [1], [0, 0, 1, 1], [], []>} : vector<5x32xf32>, vector<32x256xf32>, vector<5x256xf32> -> vector<5x256xf32>
    %c0_17 = arith.constant 0 : index
    %c0_18 = arith.constant 0 : index
    %23 = vector.load %arg9[%c0_17, %c0_18] : memref<5x1xf32, #tpu.memory_space<vmem>>, vector<5x1xf32>
    %24 = vector.broadcast %23 : vector<5x1xf32> to vector<5x256xf32>
    %25 = arith.addf %22, %24 : vector<5x256xf32>
    %c0_19 = arith.constant 0 : index
    %c0_20 = arith.constant 0 : index
    %26 = vector.load %arg10[%c0_19, %c0_20] : memref<5x256xf32, #tpu.memory_space<vmem>>, vector<5x256xf32>
    tpu.vector_store %arg10[%c0_19, %c0_20], %25 {strides = array<i32>} : memref<5x256xf32, #tpu.memory_space<vmem>>, vector<5x256xf32>,
    return
  }
  func.func @transform_0(%arg0: i32) -> (i32, i32) {
    %c0_i32 = arith.constant 0 : i32
    %c0_i32_0 = arith.constant 0 : i32
    return %c0_i32, %arg0 : i32, i32
  }
  func.func @transform_1(%arg0: i32) -> (i32, i32) {
    %c0_i32 = arith.constant 0 : i32
    %c0_i32_0 = arith.constant 0 : i32
    %c0_i32_1 = arith.constant 0 : i32
    return %c0_i32, %c0_i32_0 : i32, i32
  }
  func.func @transform_2(%arg0: i32) -> (i32, i32) {
    %c0_i32 = arith.constant 0 : i32
    %c0_i32_0 = arith.constant 0 : i32
    %c0_i32_1 = arith.constant 0 : i32
    return %c0_i32, %c0_i32_0 : i32, i32
  }
  func.func @transform_3(%arg0: i32) -> (i32, i32) {
    %c0_i32 = arith.constant 0 : i32
    %c0_i32_0 = arith.constant 0 : i32
    %c0_i32_1 = arith.constant 0 : i32
    return %c0_i32, %c0_i32_0 : i32, i32
  }
  func.func @transform_4(%arg0: i32) -> (i32, i32) {
    %c0_i32 = arith.constant 0 : i32
    %c0_i32_0 = arith.constant 0 : i32
    %c0_i32_1 = arith.constant 0 : i32
    return %c0_i32, %c0_i32_0 : i32, i32
  }
  func.func @transform_5(%arg0: i32) -> (i32, i32) {
    %c0_i32 = arith.constant 0 : i32
    %c0_i32_0 = arith.constant 0 : i32
    %c0_i32_1 = arith.constant 0 : i32
    return %c0_i32, %c0_i32_0 : i32, i32
  }
  func.func @transform_6(%arg0: i32) -> (i32, i32) {
    %c0_i32 = arith.constant 0 : i32
    %c0_i32_0 = arith.constant 0 : i32
    %c0_i32_1 = arith.constant 0 : i32
    return %c0_i32, %c0_i32_0 : i32, i32
  }
  func.func @transform_7(%arg0: i32) -> (i32, i32) {
    %c0_i32 = arith.constant 0 : i32
    %c0_i32_0 = arith.constant 0 : i32
    %c0_i32_1 = arith.constant 0 : i32
    return %c0_i32, %c0_i32_0 : i32, i32
  }
  func.func @transform_8(%arg0: i32) -> (i32, i32) {
    %c0_i32 = arith.constant 0 : i32
    %c0_i32_0 = arith.constant 0 : i32
    %c0_i32_1 = arith.constant 0 : i32
    return %c0_i32, %c0_i32_0 : i32, i32
  }
  func.func @transform_9(%arg0: i32) -> (i32, i32) {
    %c0_i32 = arith.constant 0 : i32
    %c0_i32_0 = arith.constant 0 : i32
    return %c0_i32, %arg0 : i32, i32
  }
}

</mosaic_0001>

<llo_original>
// kernel: newton2d_forward.1
$region0: #{newton2d_forward.1}
  #allocation0 [shape = 'u32[]', space=smem, size = 0x4, offset = 0x4, fixed_abs, tag = 'smem constant byte address 0x4 - core index']
  #allocation1 [shape = 'u32[144,128]{1,0:T(1,128)}', space=vmem, size = 0x12000, scoped, tag = 'internal scratch']
  %s0 = inlined_call_operand.vmem [shape: f32[1,256], index: 0, kind: input, shape index: {}]
  %s1 = inlined_call_operand.vmem [shape: f32[32,1], index: 1, kind: input, shape index: {}]
  %s2 = inlined_call_operand.vmem [shape: f32[32,1], index: 2, kind: input, shape index: {}]
  %s3 = inlined_call_operand.vmem [shape: f32[16,32], index: 3, kind: input, shape index: {}]
  %s4 = inlined_call_operand.vmem [shape: f32[16,1], index: 4, kind: input, shape index: {}]
  %s5 = inlined_call_operand.vmem [shape: f32[32,16], index: 5, kind: input, shape index: {}]
  %s6 = inlined_call_operand.vmem [shape: f32[32,1], index: 6, kind: input, shape index: {}]
  %s7 = inlined_call_operand.vmem [shape: f32[5,32], index: 7, kind: input, shape index: {}]
  %s8 = inlined_call_operand.vmem [shape: f32[5,1], index: 8, kind: input, shape index: {}]
  %s9 = inlined_call_operand.hbm [shape: f32[5,256], index: 9, kind: output, shape index: {}]
  %s10 = sld [smem:[#allocation0]]
  $region46: #{newton2d_forward.1} parent=0
    _
  %s12 = ssub.s32 1, %s10
  %s13 = scalar_select 0, %s12, %s10
  $region1: #{newton2d_forward.1} parent=0
    #allocation2 [shape = 'u8[8192]{0}', space=vmem, size = 0x2000, scoped, tag = 'output window, operand 0, single buffered']
    #allocation3 [shape = 's32[1]{0}', space=sflag, size = 0x4, scoped, tag = 'scoped memory for newton2d_forward.1']
    %14 = vsyncpa [#allocation3], 0
    // Predicated region
    $region2: #{newton2d_forward.1} parent=1 // pred_check
      _
    $region3: #{newton2d_forward.1} parent=1 // pred_check_branch
      %16 = sbr.rel (0) target = $region5
    $region4: #{newton2d_forward.1} parent=1 // pred_region
      _
    $region5: #{newton2d_forward.1} parent=1 // pred_fallthru
      _
    // Predicated region
    $region6: #{newton2d_forward.1} parent=1 // pred_check
      _
    $region7: #{newton2d_forward.1} parent=1 // pred_check_branch
      %18 = sbr.rel (0) target = $region9
    $region8: #{newton2d_forward.1} parent=1 // pred_region
      _
    $region9: #{newton2d_forward.1} parent=1 // pred_fallthru
      _
    // Predicated region
    $region10: #{newton2d_forward.1} parent=1 // pred_check
      _
    $region11: #{newton2d_forward.1} parent=1 // pred_check_branch
      %20 = sbr.rel (0) target = $region13
    $region12: #{newton2d_forward.1} parent=1 // pred_region
      _
    $region13: #{newton2d_forward.1} parent=1 // pred_fallthru
      _
    // Predicated region
    $region14: #{newton2d_forward.1} parent=1 // pred_check
      _
    $region15: #{newton2d_forward.1} parent=1 // pred_check_branch
      %22 = sbr.rel (0) target = $region17
    $region16: #{newton2d_forward.1} parent=1 // pred_region
      _
    $region17: #{newton2d_forward.1} parent=1 // pred_fallthru
      _
    // Predicated region
    $region18: #{newton2d_forward.1} parent=1 // pred_check
      _
    $region19: #{newton2d_forward.1} parent=1 // pred_check_branch
      %24 = sbr.rel (0) target = $region21
    $region20: #{newton2d_forward.1} parent=1 // pred_region
      _
    $region21: #{newton2d_forward.1} parent=1 // pred_fallthru
      _
    // Predicated region
    $region22: #{newton2d_forward.1} parent=1 // pred_check
      _
    $region23: #{newton2d_forward.1} parent=1 // pred_check_branch
      %26 = sbr.rel (0) target = $region25
    $region24: #{newton2d_forward.1} parent=1 // pred_region
      _
    $region25: #{newton2d_forward.1} parent=1 // pred_fallthru
      _
    // Predicated region
    $region26: #{newton2d_forward.1} parent=1 // pred_check
      _
    $region27: #{newton2d_forward.1} parent=1 // pred_check_branch
      %28 = sbr.rel (0) target = $region29
    $region28: #{newton2d_forward.1} parent=1 // pred_region
      _
    $region29: #{newton2d_forward.1} parent=1 // pred_fallthru
      _
    // Predicated region
    $region30: #{newton2d_forward.1} parent=1 // pred_check
      _
    $region31: #{newton2d_forward.1} parent=1 // pred_check_branch
      %30 = sbr.rel (0) target = $region33
    $region32: #{newton2d_forward.1} parent=1 // pred_region
      _
    $region33: #{newton2d_forward.1} parent=1 // pred_fallthru
      _
    // Predicated region
    $region34: #{newton2d_forward.1} parent=1 // pred_check
      _
    $region35: #{newton2d_forward.1} parent=1 // pred_check_branch
      %32 = sbr.rel (0) target = $region37
    $region36: #{newton2d_forward.1} parent=1 // pred_region
      _
    $region37: #{newton2d_forward.1} parent=1 // pred_fallthru
      _
    %v33 = vld [vmem:[%s0] sm:$0x3]
    %v34 = vld [vmem:[%s1] sm:$0xff]
    %v35 = vld [vmem:[%s1 + $0x8] sm:$0xff]
    %v36 = vld [vmem:[%s1 + $0x10] sm:$0xff]
    %v37 = vld [vmem:[%s1 + $0x18] sm:$0xff]
    %39 = vset.pattern.permute.xlu0 0
    %40 = vperm.xlu0 %39, %v34
    %v41 = vpop.permute.xlu0 %40
    %44 = vset.pattern.permute.xlu0 0
    %45 = vperm.xlu0 %44, %v35
    %v46 = vpop.permute.xlu0 %45
    %49 = vset.pattern.permute.xlu0 0
    %50 = vperm.xlu0 %49, %v36
    %v51 = vpop.permute.xlu0 %50
    %54 = vset.pattern.permute.xlu0 0
    %55 = vperm.xlu0 %54, %v37
    %v56 = vpop.permute.xlu0 %55
    %v59 = vlaneseq
    %v60 = vshrl.u32 %v59, 7
    %v61 = vsub.s32 0, %v60
    %v62 = vrot.slane %v33, %v61
    %v63 = vlaneseq
    %v64 = vshrl.u32 %v63, 7
    %v65 = vsub.s32 1, %v64
    %v66 = vrot.slane %v33, %v65
    %v69 = vmul.f32 %v41, %v62
    %v70 = vmul.f32 %v41, %v66
    %v71 = vmul.f32 %v46, %v62
    %v72 = vmul.f32 %v46, %v66
    %v73 = vmul.f32 %v51, %v62
    %v74 = vmul.f32 %v51, %v66
    %v75 = vmul.f32 %v56, %v62
    %v76 = vmul.f32 %v56, %v66
    %v77 = vld [vmem:[%s2] sm:$0xff]
    %v78 = vld [vmem:[%s2 + $0x8] sm:$0xff]
    %v79 = vld [vmem:[%s2 + $0x10] sm:$0xff]
    %v80 = vld [vmem:[%s2 + $0x18] sm:$0xff]
    %82 = vset.pattern.permute.xlu0 0
    %83 = vperm.xlu0 %82, %v77
    %v84 = vpop.permute.xlu0 %83
    %87 = vset.pattern.permute.xlu0 0
    %88 = vperm.xlu0 %87, %v78
    %v89 = vpop.permute.xlu0 %88
    %92 = vset.pattern.permute.xlu0 0
    %93 = vperm.xlu0 %92, %v79
    %v94 = vpop.permute.xlu0 %93
    %97 = vset.pattern.permute.xlu0 0
    %98 = vperm.xlu0 %97, %v80
    %v99 = vpop.permute.xlu0 %98
    %v101 = vadd.f32 %v69, %v84
    %v102 = vadd.f32 %v70, %v84
    %v103 = vadd.f32 %v71, %v89
    %v104 = vadd.f32 %v72, %v89
    %v105 = vadd.f32 %v73, %v94
    %v106 = vadd.f32 %v74, %v94
    %v107 = vadd.f32 %v75, %v99
    %v108 = vadd.f32 %v76, %v99
    %v109 = vtanh.pop %v101
    %v110 = vtanh.pop %v102
    %v111 = vtanh.pop %v103
    %v112 = vtanh.pop %v104
    %v113 = vtanh.pop %v105
    %v114 = vtanh.pop %v106
    %v115 = vtanh.pop %v107
    %v116 = vtanh.pop %v108
    %v117 = vld [vmem:[%s3] sm:$0xff]
    %v118 = vld [vmem:[%s3 + $0x8] sm:$0xff]
    %v119 = vld [vmem:[%s4] sm:$0xff]
    %v120 = vld [vmem:[%s4 + $0x8] sm:$0xff]
    %122 = vset.pattern.permute.xlu0 0
    %123 = vperm.xlu0 %122, %v119
    %v124 = vpop.permute.xlu0 %123
    %127 = vset.pattern.permute.xlu0 0
    %128 = vperm.xlu0 %127, %v120
    %v129 = vpop.permute.xlu0 %128
    %vm131 = vcmask 261120
    %v133 = vsel %vm131, %v117, 0
    %v136 = vsel %vm131, %v118, 0
    %138 = vmatprep.subr.mxu0 %v110
    %139 = vmatpush1.msra.mxu0 %v109
    %140 = vmatprep.subr.mxu0 %v112
    %141 = vmatpush1.msra.mxu0 %v111
    %142 = vmatprep.subr.mxu0 %v114
    %143 = vmatpush1.msra.mxu0 %v113
    %144 = vmatprep.subr.mxu0 %v116
    %145 = vmatpush1.msra.mxu0 %v115
    %146 = vmatprep.subr.mxu0 0.0
    %147 = vmatpush1.msra.mxu0 0.0
    %148 = vmatprep.subr.mxu0 0.0
    %149 = vmatpush1.msra.mxu0 0.0
    %150 = vmatprep.subr.mxu0 0.0
    %151 = vmatpush1.msra.mxu0 0.0
    %152 = vmatprep.subr.mxu0 0.0
    %153 = vmatpush1.msra.mxu0 0.0
    %154 = vmatprep.subr.mxu0 0.0
    %155 = vmatpush1.msra.mxu0 0.0
    %156 = vmatprep.subr.mxu0 0.0
    %157 = vmatpush1.msra.mxu0 0.0
    %158 = vmatprep.subr.mxu0 0.0
    %159 = vmatpush1.msra.mxu0 0.0
    %160 = vmatprep.subr.mxu0 0.0
    %161 = vmatpush1.msra.mxu0 0.0
    %162 = vmatprep.subr.mxu0 0.0
    %163 = vmatpush1.msra.mxu0 0.0
    %164 = vmatprep.subr.mxu0 0.0
    %165 = vmatpush1.msra.mxu0 0.0
    %166 = vmatprep.subr.mxu0 0.0
    %167 = vmatpush1.msra.mxu0 0.0
    %168 = vmatprep.subr.mxu0 0.0
    %169 = vmatpush1.msra.mxu0 0.0
    %170 = vmatprep.subr.mxu0 0.0
    %171 = vmatpush1.msra.mxu0 0.0
    %172 = vmatprep.subr.mxu0 0.0
    %173 = vmatpush1.msra.mxu0 0.0
    %174 = vmatprep.subr.mxu0 0.0
    %175 = vmatpush1.msra.mxu0 0.0
    %176 = vmatprep.subr.mxu0 0.0
    %177 = vmatpush1.msra.mxu0 0.0
    %178 = vmatprep.subr.mxu0 0.0
    %179 = vmatpush1.msra.mxu0 0.0
    %180 = vmatprep.subr.mxu0 0.0
    %181 = vmatpush1.msra.mxu0 0.0
    %182 = vmatprep.subr.mxu0 0.0
    %183 = vmatpush1.msra.mxu0 0.0
    %184 = vmatprep.subr.mxu0 0.0
    %185 = vmatpush1.msra.mxu0 0.0
    %186 = vmatprep.subr.mxu0 0.0
    %187 = vmatpush1.msra.mxu0 0.0
    %188 = vmatprep.subr.mxu0 0.0
    %189 = vmatpush1.msra.mxu0 0.0
    %190 = vmatprep.subr.mxu0 0.0
    %191 = vmatpush1.msra.mxu0 0.0
    %192 = vmatprep.subr.mxu0 0.0
    %193 = vmatpush1.msra.mxu0 0.0
    %194 = vmatprep.subr.mxu0 0.0
    %195 = vmatpush1.msra.mxu0 0.0
    %196 = vmatprep.subr.mxu0 0.0
    %197 = vmatpush1.msra.mxu0 0.0
    %198 = vmatprep.subr.mxu0 0.0
    %199 = vmatpush1.msra.mxu0 0.0
    %200 = vmatprep.subr.mxu0 0.0
    %201 = vmatpush1.msra.mxu0 0.0
    %202 = vmatprep.mubr.f32.mxu0 0.0
    %203 = vmatmul.mubr.f32.gmra.mrb[0].mxu0 %v133
    %v204 = vpop.f32.mrb[0].mxu0
    %v205 = vadd.f32 %v124, %v204
    %v206 = vpop.f32.mrb[0].mxu0
    %v207 = vadd.f32 %v124, %v206
    %208 = vmatprep.mubr.f32.mxu0 0.0
    %209 = vmatmul.mubr.f32.gmra.mrb[0].mxu0 %v136
    %v210 = vpop.f32.mrb[0].mxu0
    %v211 = vadd.f32 %v129, %v210
    %v212 = vpop.f32.mrb[0].mxu0
    %v213 = vadd.f32 %v129, %v212
    %214 = vdwg.mxu0
    %v215 = vtanh.pop %v205
    %v216 = vtanh.pop %v207
    %v217 = vtanh.pop %v211
    %v218 = vtanh.pop %v213
    %v219 = vld [vmem:[%s5] sm:$0xff]
    %v220 = vld [vmem:[%s5 + $0x8] sm:$0xff]
    %v221 = vld [vmem:[%s5 + $0x10] sm:$0xff]
    %v222 = vld [vmem:[%s5 + $0x18] sm:$0xff]
    %v223 = vld [vmem:[%s6] sm:$0xff]
    %v224 = vld [vmem:[%s6 + $0x8] sm:$0xff]
    %v225 = vld [vmem:[%s6 + $0x10] sm:$0xff]
    %v226 = vld [vmem:[%s6 + $0x18] sm:$0xff]
    %228 = vset.pattern.permute.xlu0 0
    %229 = vperm.xlu0 %228, %v223
    %v230 = vpop.permute.xlu0 %229
    %233 = vset.pattern.permute.xlu0 0
    %234 = vperm.xlu0 %233, %v224
    %v235 = vpop.permute.xlu0 %234
    %238 = vset.pattern.permute.xlu0 0
    %239 = vperm.xlu0 %238, %v225
    %v240 = vpop.permute.xlu0 %239
    %243 = vset.pattern.permute.xlu0 0
    %244 = vperm.xlu0 %243, %v226
    %v245 = vpop.permute.xlu0 %244
    %vm247 = vcmask 130048
    %v249 = vsel %vm247, %v219, 0
    %v252 = vsel %vm247, %v220, 0
    %v255 = vsel %vm247, %v221, 0
    %v258 = vsel %vm247, %v222, 0
    %260 = vmatprep.subr.mxu0 %v216
    %261 = vmatpush1.msra.mxu0 %v215
    %262 = vmatprep.subr.mxu0 %v218
    %263 = vmatpush1.msra.mxu0 %v217
    %264 = vmatprep.subr.mxu0 0.0
    %265 = vmatpush1.msra.mxu0 0.0
    %266 = vmatprep.subr.mxu0 0.0
    %267 = vmatpush1.msra.mxu0 0.0
    %268 = vmatprep.subr.mxu0 0.0
    %269 = vmatpush1.msra.mxu0 0.0
    %270 = vmatprep.subr.mxu0 0.0
    %271 = vmatpush1.msra.mxu0 0.0
    %272 = vmatprep.subr.mxu0 0.0
    %273 = vmatpush1.msra.mxu0 0.0
    %274 = vmatprep.subr.mxu0 0.0
    %275 = vmatpush1.msra.mxu0 0.0
    %276 = vmatprep.subr.mxu0 0.0
    %277 = vmatpush1.msra.mxu0 0.0
    %278 = vmatprep.subr.mxu0 0.0
    %279 = vmatpush1.msra.mxu0 0.0
    %280 = vmatprep.subr.mxu0 0.0
    %281 = vmatpush1.msra.mxu0 0.0
    %282 = vmatprep.subr.mxu0 0.0
    %283 = vmatpush1.msra.mxu0 0.0
    %284 = vmatprep.subr.mxu0 0.0
    %285 = vmatpush1.msra.mxu0 0.0
    %286 = vmatprep.subr.mxu0 0.0
    %287 = vmatpush1.msra.mxu0 0.0
    %288 = vmatprep.subr.mxu0 0.0
    %289 = vmatpush1.msra.mxu0 0.0
    %290 = vmatprep.subr.mxu0 0.0
    %291 = vmatpush1.msra.mxu0 0.0
    %292 = vmatprep.subr.mxu0 0.0
    %293 = vmatpush1.msra.mxu0 0.0
    %294 = vmatprep.subr.mxu0 0.0
    %295 = vmatpush1.msra.mxu0 0.0
    %296 = vmatprep.subr.mxu0 0.0
    %297 = vmatpush1.msra.mxu0 0.0
    %298 = vmatprep.subr.mxu0 0.0
    %299 = vmatpush1.msra.mxu0 0.0
    %300 = vmatprep.subr.mxu0 0.0
    %301 = vmatpush1.msra.mxu0 0.0
    %302 = vmatprep.subr.mxu0 0.0
    %303 = vmatpush1.msra.mxu0 0.0
    %304 = vmatprep.subr.mxu0 0.0
    %305 = vmatpush1.msra.mxu0 0.0
    %306 = vmatprep.subr.mxu0 0.0
    %307 = vmatpush1.msra.mxu0 0.0
    %308 = vmatprep.subr.mxu0 0.0
    %309 = vmatpush1.msra.mxu0 0.0
    %310 = vmatprep.subr.mxu0 0.0
    %311 = vmatpush1.msra.mxu0 0.0
    %312 = vmatprep.subr.mxu0 0.0
    %313 = vmatpush1.msra.mxu0 0.0
    %314 = vmatprep.subr.mxu0 0.0
    %315 = vmatpush1.msra.mxu0 0.0
    %316 = vmatprep.subr.mxu0 0.0
    %317 = vmatpush1.msra.mxu0 0.0
    %318 = vmatprep.subr.mxu0 0.0
    %319 = vmatpush1.msra.mxu0 0.0
    %320 = vmatprep.subr.mxu0 0.0
    %321 = vmatpush1.msra.mxu0 0.0
    %322 = vmatprep.subr.mxu0 0.0
    %323 = vmatpush1.msra.mxu0 0.0
    %324 = vmatprep.mubr.f32.mxu0 0.0
    %325 = vmatmul.mubr.f32.gmra.mrb[0].mxu0 %v249
    %v326 = vpop.f32.mrb[0].mxu0
    %v327 = vadd.f32 %v230, %v326
    %v328 = vpop.f32.mrb[0].mxu0
    %v329 = vadd.f32 %v230, %v328
    %330 = vmatprep.mubr.f32.mxu0 0.0
    %331 = vmatmul.mubr.f32.gmra.mrb[0].mxu0 %v252
    %v332 = vpop.f32.mrb[0].mxu0
    %v333 = vadd.f32 %v235, %v332
    %v334 = vpop.f32.mrb[0].mxu0
    %v335 = vadd.f32 %v235, %v334
    %336 = vmatprep.mubr.f32.mxu0 0.0
    %337 = vmatmul.mubr.f32.gmra.mrb[0].mxu0 %v255
    %v338 = vpop.f32.mrb[0].mxu0
    %v339 = vadd.f32 %v240, %v338
    %v340 = vpop.f32.mrb[0].mxu0
    %v341 = vadd.f32 %v240, %v340
    %342 = vmatprep.mubr.f32.mxu0 0.0
    %343 = vmatmul.mubr.f32.gmra.mrb[0].mxu0 %v258
    %v344 = vpop.f32.mrb[0].mxu0
    %v345 = vadd.f32 %v245, %v344
    %v346 = vpop.f32.mrb[0].mxu0
    %v347 = vadd.f32 %v245, %v346
    %348 = vdwg.mxu0
    %v349 = vtanh.pop %v327
    %v350 = vtanh.pop %v329
    %v351 = vtanh.pop %v333
    %v352 = vtanh.pop %v335
    %v353 = vtanh.pop %v339
    %v354 = vtanh.pop %v341
    %v355 = vtanh.pop %v345
    %v356 = vtanh.pop %v347
    %v357 = vld [vmem:[%s7] sm:$0x1f]
    %v358 = vld [vmem:[%s8] sm:$0x1f]
    %360 = vset.pattern.permute.xlu0 0
    %361 = vperm.xlu0 %360, %v358
    %v362 = vpop.permute.xlu0 %361
    %v365 = vsel %vm131, %v357, 0
    %367 = vmatprep.subr.mxu0 %v350
    %368 = vmatpush1.msra.mxu0 %v349
    %369 = vmatprep.subr.mxu0 %v352
    %370 = vmatpush1.msra.mxu0 %v351
    %371 = vmatprep.subr.mxu0 %v354
    %372 = vmatpush1.msra.mxu0 %v353
    %373 = vmatprep.subr.mxu0 %v356
    %374 = vmatpush1.msra.mxu0 %v355
    %375 = vmatprep.subr.mxu0 0.0
    %376 = vmatpush1.msra.mxu0 0.0
    %377 = vmatprep.subr.mxu0 0.0
    %378 = vmatpush1.msra.mxu0 0.0
    %379 = vmatprep.subr.mxu0 0.0
    %380 = vmatpush1.msra.mxu0 0.0
    %381 = vmatprep.subr.mxu0 0.0
    %382 = vmatpush1.msra.mxu0 0.0
    %383 = vmatprep.subr.mxu0 0.0
    %384 = vmatpush1.msra.mxu0 0.0
    %385 = vmatprep.subr.mxu0 0.0
    %386 = vmatpush1.msra.mxu0 0.0
    %387 = vmatprep.subr.mxu0 0.0
    %388 = vmatpush1.msra.mxu0 0.0
    %389 = vmatprep.subr.mxu0 0.0
    %390 = vmatpush1.msra.mxu0 0.0
    %391 = vmatprep.subr.mxu0 0.0
    %392 = vmatpush1.msra.mxu0 0.0
    %393 = vmatprep.subr.mxu0 0.0
    %394 = vmatpush1.msra.mxu0 0.0
    %395 = vmatprep.subr.mxu0 0.0
    %396 = vmatpush1.msra.mxu0 0.0
    %397 = vmatprep.subr.mxu0 0.0
    %398 = vmatpush1.msra.mxu0 0.0
    %399 = vmatprep.subr.mxu0 0.0
    %400 = vmatpush1.msra.mxu0 0.0
    %401 = vmatprep.subr.mxu0 0.0
    %402 = vmatpush1.msra.mxu0 0.0
    %403 = vmatprep.subr.mxu0 0.0
    %404 = vmatpush1.msra.mxu0 0.0
    %405 = vmatprep.subr.mxu0 0.0
    %406 = vmatpush1.msra.mxu0 0.0
    %407 = vmatprep.subr.mxu0 0.0
    %408 = vmatpush1.msra.mxu0 0.0
    %409 = vmatprep.subr.mxu0 0.0
    %410 = vmatpush1.msra.mxu0 0.0
    %411 = vmatprep.subr.mxu0 0.0
    %412 = vmatpush1.msra.mxu0 0.0
    %413 = vmatprep.subr.mxu0 0.0
    %414 = vmatpush1.msra.mxu0 0.0
    %415 = vmatprep.subr.mxu0 0.0
    %416 = vmatpush1.msra.mxu0 0.0
    %417 = vmatprep.subr.mxu0 0.0
    %418 = vmatpush1.msra.mxu0 0.0
    %419 = vmatprep.subr.mxu0 0.0
    %420 = vmatpush1.msra.mxu0 0.0
    %421 = vmatprep.subr.mxu0 0.0
    %422 = vmatpush1.msra.mxu0 0.0
    %423 = vmatprep.subr.mxu0 0.0
    %424 = vmatpush1.msra.mxu0 0.0
    %425 = vmatprep.subr.mxu0 0.0
    %426 = vmatpush1.msra.mxu0 0.0
    %427 = vmatprep.subr.mxu0 0.0
    %428 = vmatpush1.msra.mxu0 0.0
    %429 = vmatprep.subr.mxu0 0.0
    %430 = vmatpush1.msra.mxu0 0.0
    %431 = vmatprep.mubr.f32.mxu0 0.0
    %432 = vmatmul.mubr.f32.gmra.mrb[0].mxu0 %v365
    %v433 = vpop.f32.mrb[0].mxu0
    %v434 = vadd.f32 %v362, %v433
    %v435 = vpop.f32.mrb[0].mxu0
    %v436 = vadd.f32 %v362, %v435
    %437 = vdwg.mxu0
    %438 = vst [vmem:[#allocation2] sm:$0x1f] %v434
    %439 = vst [vmem:[#allocation2 + $0x8] sm:$0x1f] %v436
    // Predicated region
    $region38: #{newton2d_forward.1} parent=1 // pred_check
      _
    $region39: #{newton2d_forward.1} parent=1 // pred_check_branch
      %441 = sbr.rel (0) target = $region41
    $region40: #{newton2d_forward.1} parent=1 // pred_region
      %s443 = ssub.s32 256, 256
      %444 = vsyncadd [#allocation3], %s443
      %s446 = sshll.u32 [#allocation2], 4
      %s447 = int_to_ptr.vmem [resolvable:$true] %s446
      %449 = dma.vmem_to_hbm [thread:$0]  %s447, 256, %s9, [#allocation3]
    $region41: #{newton2d_forward.1} parent=1 // pred_fallthru
      _
    // Predicated region
    $region42: #{newton2d_forward.1} parent=1 // pred_check
      _
    $region43: #{newton2d_forward.1} parent=1 // pred_check_branch
      %451 = sbr.rel (0) target = $region45
    $region44: #{newton2d_forward.1} parent=1 // pred_region
      %452 = dma.done [#allocation3], 256
    $region45: #{newton2d_forward.1} parent=1 // pred_fallthru
      _
    %453 = vsyncpa [#allocation3], 1

</llo_original>
